<compile_context>
chip_gen: v7x
topology: tpu7x:2x2x1
jax: 0.10.0
libtpu: 0.0.40
codegen_flags: <defaults>
</compile_context>

<pallas_src>
import jax
import jax.numpy as jnp
from jax.experimental import pallas as pl
from jax.experimental.pallas import tpu as pltpu

LANE = 128


def _make_kernel(C, S, tile_s, acc_rows, bpc, needs_mask):
    Cm1 = C - 1
    groups = tile_s // acc_rows

    def fold(x):
        # (tile_s, 128) -> (acc_rows, 128) with element-wise VPU adds only.
        if groups == 1:
            return x
        return jnp.sum(x.reshape(groups, acc_rows, LANE), axis=0)

    def kernel(pred_ref, tgt_ref, num_out_ref, den_out_ref, num_acc, den_acc):
        s = pl.program_id(2)

        @pl.when(s == 0)
        def _():
            num_acc[...] = jnp.zeros_like(num_acc)
            den_acc[...] = jnp.zeros_like(den_acc)

        # Channel-wise max of the logits (element-wise maxes over C slabs).
        p0 = pred_ref[0, 0]
        pmax = p0
        for i in range(1, C):
            pmax = jnp.maximum(pmax, pred_ref[0, i])

        # First-max tie-break == torch.argmax's first index on ties.
        # NOTE: NaN logits select no class (torch.argmax would return the NaN
        # channel); only relevant if inputs can contain NaN.
        seen = p0 == pmax
        if needs_mask:
            ck = pl.program_id(1)
            row0 = (ck * bpc + s) * tile_s
            rows = jax.lax.broadcasted_iota(jnp.int32, (tile_s, LANE), 0)
            valid = (rows + row0) < S
            # Invalid rows claim no foreground class.
            seen = jnp.logical_or(seen, jnp.logical_not(valid))

        for i in range(1, C):
            eq_i = pred_ref[0, i] == pmax
            mask_i = jnp.logical_and(eq_i, jnp.logical_not(seen))
            if i < C - 1:
                seen = jnp.logical_or(seen, eq_i)
            t_i = tgt_ref[0, i].astype(jnp.float32)
            if needs_mask:
                t_i = jnp.where(valid, t_i, 0.0)
            # pred one-hot is 0/1, so pred*pred == pred == mask.
            num_acc[i - 1] += fold(jnp.where(mask_i, t_i, 0.0))
            den_acc[i - 1] += fold(jnp.where(mask_i, 1.0, 0.0) + t_i * t_i)

        # One cross-lane + cross-sublane reduce per (batch, chunk).
        @pl.when(s == pl.num_programs(2) - 1)
        def _():
            num_out_ref[0, 0] = jnp.sum(jnp.sum(num_acc[...], axis=2),
                                        axis=1, keepdims=True)
            den_out_ref[0, 0] = jnp.sum(jnp.sum(den_acc[...], axis=2),
                                        axis=1, keepdims=True)

    return kernel


def dice_coefficient(predict, target, *, max_block_bytes=6 * 1024 * 1024):
    """Pallas equivalent of DiceCoefficient.forward.

    Returns a (C-1,) array [dice_1, ..., dice_{C-1}] (background skipped) --
    the same values, in the same order, as the list the PyTorch module
    returns.
    """
    assert predict.shape == target.shape, "predict & target shape do not match"
    B, C, H, W = predict.shape
    if C < 2:
        return jnp.zeros((0,), jnp.float32)
    Cm1 = C - 1
    HW = H * W

    # Lane-dense view (B, C, S, 128). Free metadata reshape when HW % 128 == 0;
    # otherwise zero-pad (zero logits argmax to class 0, zero targets), which
    # only happens for uncommon spatial sizes.
    p = predict.reshape(B, C, HW)
    t = target.reshape(B, C, HW)
    S = int(pl.cdiv(HW, LANE))
    rem = S * LANE - HW
    if rem:
        p = jnp.pad(p, ((0, 0), (0, 0), (0, rem)))
        t = jnp.pad(t, ((0, 0), (0, 0), (0, rem)))
    p = p.reshape(B, C, S, LANE)
    t = t.reshape(B, C, S, LANE)

    # Spatial tile: cap the combined (predict + target) block at
    # ~max_block_bytes so 2 inputs x 2 pipeline buffers (~2x that) stay well
    # inside the scoped-VMEM budget of v5e / v6e / v7x.
    bytes_per_row = C * LANE * (p.dtype.itemsize + t.dtype.itemsize)
    cap_rows = max(16, (max_block_bytes // bytes_per_row) // 16 * 16)
    if S <= cap_rows:
        tile_s = S                                   # full dim, any value OK
    else:
        nb = int(pl.cdiv(S, cap_rows))
        tile_s = (int(pl.cdiv(S, nb)) + 15) // 16 * 16   # balanced, mult of 16
    total_blocks = int(pl.cdiv(S, tile_s))
    acc_rows = 8 if tile_s % 8 == 0 else tile_s      # latter only if tile_s == S

    # Spatial chunk split so a 2-TensorCore chip (v7x) has >= 2 parallel grid
    # cells even when the batch is 1 (or odd).
    nchunk = 2 if (B % 2 == 1 and total_blocks >= 2) else 1
    bpc = int(pl.cdiv(total_blocks, nchunk))         # spatial blocks per chunk
    clamp = nchunk * bpc != total_blocks
    needs_mask = (S % tile_s != 0) or clamp

    def in_index(b, ck, s):
        sb = ck * bpc + s
        if clamp:  # overhang blocks re-read the last real block, fully masked
            sb = jnp.minimum(sb, total_blocks - 1)
        return (b, 0, sb, 0)

    in_spec = pl.BlockSpec((1, C, tile_s, LANE), in_index)
    out_spec = pl.BlockSpec((1, 1, Cm1, 1), lambda b, ck, s: (b, ck, 0, 0))

    kernel = _make_kernel(C, S, tile_s, acc_rows, bpc, needs_mask)

    num_part, den_part = pl.pallas_call(
        kernel,
        out_shape=(jax.ShapeDtypeStruct((B, nchunk, Cm1, 1), jnp.float32),
                   jax.ShapeDtypeStruct((B, nchunk, Cm1, 1), jnp.float32)),
        grid_spec=pltpu.PrefetchScalarGridSpec(
            num_scalar_prefetch=0,
            grid=(B, nchunk, bpc),
            in_specs=[in_spec, in_spec],
            out_specs=[out_spec, out_spec],
            scratch_shapes=[
                pltpu.VMEM((Cm1, acc_rows, LANE), jnp.float32),   # num partials
                pltpu.VMEM((Cm1, acc_rows, LANE), jnp.float32),   # den partials
            ],
        ),
        compiler_params=pltpu.CompilerParams(
            dimension_semantics=("parallel", "parallel", "arbitrary"),
            vmem_limit_bytes=28 * 1024 * 1024,
        ),
    )(p, t)

    # Finalize in the wrapper: sum spatial chunks, Laplace smoothing, per-batch
    # divide, batch mean (same association as the untiled formulation).
    num = jnp.sum(num_part[..., 0], axis=1)          # (B, C-1)
    den = jnp.sum(den_part[..., 0], axis=1)
    dice = (2.0 * num + 1.0) / (den + 1.0)
    return jnp.mean(dice, axis=0)                    # (C-1,)


def _reference(predict, target):
    """Plain-JAX reference reproducing the PyTorch forward."""
    am = jnp.argmax(predict, axis=1)
    out = []
    for i in range(1, target.shape[1]):
        pred = (am == i).astype(jnp.float32).reshape(predict.shape[0], -1)
        tg = target[:, i].reshape(target.shape[0], -1)
        num = 2.0 * jnp.sum(pred * tg, axis=1) + 1.0
        den = jnp.sum(pred * pred + tg * tg, axis=1) + 1.0
        out.append(jnp.mean(num / den))
    return out


def _check(dice, ref, tag):
    assert len(ref) == dice.shape[0], (tag, dice.shape, len(ref))
    for i, r in enumerate(ref):
        assert abs(float(dice[i]) - float(r)) < 1e-5, (tag, i, float(dice[i]), float(r))


if __name__ == "__main__":
    key = jax.random.PRNGKey(0)

    # --- Test 1: small canonical shape (fast path: no pad, no mask) ---
    B, C, H, W = 2, 4, 16, 16
    k1, k2, k3, k4 = jax.random.split(key, 4)
    predict = jax.random.normal(k1, (B, C, H, W), dtype=jnp.float32)
    labels = jax.random.randint(k2, (B, H, W), 0, C)
    target = jnp.transpose(jax.nn.one_hot(labels, C, dtype=jnp.float32),
                           (0, 3, 1, 2))
    dice = jax.block_until_ready(dice_coefficient(predict, target))
    _check(dice, _reference(predict, target), "t1")

    # --- Test 2: ragged spatial size + B=1 -> exercises pad fallback, the
    #     in-kernel row mask, the chunk-parallel split and block-index clamp.
    B2, C2, H2, W2 = 1, 3, 63, 80
    predict2 = jax.random.normal(k3, (B2, C2, H2, W2), dtype=jnp.float32)
    labels2 = jax.random.randint(k4, (B2, H2, W2), 0, C2)
    target2 = jnp.transpose(jax.nn.one_hot(labels2, C2, dtype=jnp.float32),
                            (0, 3, 1, 2))
    dice2 = jax.block_until_ready(
        dice_coefficient(predict2, target2, max_block_bytes=48 * 1024))
    _check(dice2, _reference(predict2, target2), "t2")

    print("KERNEL_OK")
</pallas_src>

<mosaic_0001>
module attributes {stable_mosaic.version = 11 : i64} {
  func.func @kernel(%arg0: i32, %arg1: i32, %arg2: i32, %arg3: memref<1x4x2x128xf32, #tpu.memory_space<vmem>>, %arg4: memref<1x4x2x128xf32, #tpu.memory_space<vmem>>, %arg5: memref<1x1x3x1xf32, #tpu.memory_space<vmem>>, %arg6: memref<1x1x3x1xf32, #tpu.memory_space<vmem>>, %arg7: memref<3x2x128xf32, #tpu.memory_space<vmem>>, %arg8: memref<3x2x128xf32, #tpu.memory_space<vmem>>) attributes {dimension_semantics = [#tpu.dimension_semantics<parallel>, #tpu.dimension_semantics<parallel>, #tpu.dimension_semantics<arbitrary>], iteration_bounds = array<i64: 2, 1, 1>, scalar_prefetch = 0 : i64, scratch_operands = 2 : i64, tpu.core_type = #tpu.core_type<tc>, window_params = [{transform_indices = @transform_0, window_bounds = array<i64: 1, 4, 2, 128>}, {transform_indices = @transform_1, window_bounds = array<i64: 1, 4, 2, 128>}, {transform_indices = @transform_2, window_bounds = array<i64: 1, 1, 3, 1>}, {transform_indices = @transform_3, window_bounds = array<i64: 1, 1, 3, 1>}]} {
    %c0_i32 = arith.constant 0 : i32
    %0 = arith.cmpi eq, %arg2, %c0_i32 : i32
    %1 = arith.extui %0 : i1 to i32
    %c0_i32_0 = arith.constant 0 : i32
    %2 = arith.cmpi ne, %1, %c0_i32_0 : i32
    scf.if %2 {
      %cst_86 = arith.constant 0.000000e+00 : f32
      %98 = vector.broadcast %cst_86 : f32 to vector<3x2x128xf32>
      %c0_87 = arith.constant 0 : index
      %c0_88 = arith.constant 0 : index
      %c0_89 = arith.constant 0 : index
      %99 = vector.load %arg7[%c0_87, %c0_88, %c0_89] : memref<3x2x128xf32, #tpu.memory_space<vmem>>, vector<3x2x128xf32>
      tpu.vector_store %arg7[%c0_87, %c0_88, %c0_89], %98 {strides = array<i32>} : memref<3x2x128xf32, #tpu.memory_space<vmem>>, vector<3x2x128xf32>,
      %cst_90 = arith.constant 0.000000e+00 : f32
      %100 = vector.broadcast %cst_90 : f32 to vector<3x2x128xf32>
      %c0_91 = arith.constant 0 : index
      %c0_92 = arith.constant 0 : index
      %c0_93 = arith.constant 0 : index
      %101 = vector.load %arg8[%c0_91, %c0_92, %c0_93] : memref<3x2x128xf32, #tpu.memory_space<vmem>>, vector<3x2x128xf32>
      tpu.vector_store %arg8[%c0_91, %c0_92, %c0_93], %100 {strides = array<i32>} : memref<3x2x128xf32, #tpu.memory_space<vmem>>, vector<3x2x128xf32>,
    } else {
    }
    %c0 = arith.constant 0 : index
    %c0_1 = arith.constant 0 : index
    %c0_2 = arith.constant 0 : index
    %c0_3 = arith.constant 0 : index
    %3 = vector.load %arg3[%c0, %c0_1, %c0_2, %c0_3] : memref<1x4x2x128xf32, #tpu.memory_space<vmem>>, vector<1x1x2x128xf32>
    %4 = vector.shape_cast %3 : vector<1x1x2x128xf32> to vector<2x128xf32>
    %c0_4 = arith.constant 0 : index
    %c1 = arith.constant 1 : index
    %c0_5 = arith.constant 0 : index
    %c0_6 = arith.constant 0 : index
    %5 = vector.load %arg3[%c0_4, %c1, %c0_5, %c0_6] : memref<1x4x2x128xf32, #tpu.memory_space<vmem>>, vector<1x1x2x128xf32>
    %6 = vector.shape_cast %5 : vector<1x1x2x128xf32> to vector<2x128xf32>
    %7 = arith.maximumf %4, %6 : vector<2x128xf32>
    %c0_7 = arith.constant 0 : index
    %c2 = arith.constant 2 : index
    %c0_8 = arith.constant 0 : index
    %c0_9 = arith.constant 0 : index
    %8 = vector.load %arg3[%c0_7, %c2, %c0_8, %c0_9] : memref<1x4x2x128xf32, #tpu.memory_space<vmem>>, vector<1x1x2x128xf32>
    %9 = vector.shape_cast %8 : vector<1x1x2x128xf32> to vector<2x128xf32>
    %10 = arith.maximumf %7, %9 : vector<2x128xf32>
    %c0_10 = arith.constant 0 : index
    %c3 = arith.constant 3 : index
    %c0_11 = arith.constant 0 : index
    %c0_12 = arith.constant 0 : index
    %11 = vector.load %arg3[%c0_10, %c3, %c0_11, %c0_12] : memref<1x4x2x128xf32, #tpu.memory_space<vmem>>, vector<1x1x2x128xf32>
    %12 = vector.shape_cast %11 : vector<1x1x2x128xf32> to vector<2x128xf32>
    %13 = arith.maximumf %10, %12 : vector<2x128xf32>
    %14 = arith.cmpf oeq, %4, %13 : vector<2x128xf32>
    %c0_13 = arith.constant 0 : index
    %c1_14 = arith.constant 1 : index
    %c0_15 = arith.constant 0 : index
    %c0_16 = arith.constant 0 : index
    %15 = vector.load %arg3[%c0_13, %c1_14, %c0_15, %c0_16] : memref<1x4x2x128xf32, #tpu.memory_space<vmem>>, vector<1x1x2x128xf32>
    %16 = vector.shape_cast %15 : vector<1x1x2x128xf32> to vector<2x128xf32>
    %17 = arith.cmpf oeq, %16, %13 : vector<2x128xf32>
    %cst = arith.constant dense<true> : vector<2x128xi1>
    %18 = arith.xori %14, %cst : vector<2x128xi1>
    %19 = arith.andi %17, %18 : vector<2x128xi1>
    %20 = arith.ori %14, %17 : vector<2x128xi1>
    %c0_17 = arith.constant 0 : index
    %c1_18 = arith.constant 1 : index
    %c0_19 = arith.constant 0 : index
    %c0_20 = arith.constant 0 : index
    %21 = vector.load %arg4[%c0_17, %c1_18, %c0_19, %c0_20] : memref<1x4x2x128xf32, #tpu.memory_space<vmem>>, vector<1x1x2x128xf32>
    %22 = vector.shape_cast %21 : vector<1x1x2x128xf32> to vector<2x128xf32>
    %c0_21 = arith.constant 0 : index
    %c0_22 = arith.constant 0 : index
    %c0_23 = arith.constant 0 : index
    %23 = vector.load %arg7[%c0_21, %c0_22, %c0_23] : memref<3x2x128xf32, #tpu.memory_space<vmem>>, vector<1x2x128xf32>
    %24 = vector.shape_cast %23 : vector<1x2x128xf32> to vector<2x128xf32>
    %cst_24 = arith.constant 0.000000e+00 : f32
    %25 = vector.broadcast %cst_24 : f32 to vector<2x128xf32>
    %26 = arith.select %19, %22, %25 : vector<2x128xi1>, vector<2x128xf32>
    %27 = arith.addf %24, %26 : vector<2x128xf32>
    %c0_25 = arith.constant 0 : index
    %c0_26 = arith.constant 0 : index
    %c0_27 = arith.constant 0 : index
    %28 = vector.load %arg7[%c0_25, %c0_26, %c0_27] : memref<3x2x128xf32, #tpu.memory_space<vmem>>, vector<1x2x128xf32>
    %29 = vector.shape_cast %28 : vector<1x2x128xf32> to vector<2x128xf32>
    %30 = vector.shape_cast %27 : vector<2x128xf32> to vector<1x2x128xf32>
    tpu.vector_store %arg7[%c0_25, %c0_26, %c0_27], %30 {strides = array<i32>} : memref<3x2x128xf32, #tpu.memory_space<vmem>>, vector<1x2x128xf32>,
    %c0_28 = arith.constant 0 : index
    %c0_29 = arith.constant 0 : index
    %c0_30 = arith.constant 0 : index
    %31 = vector.load %arg8[%c0_28, %c0_29, %c0_30] : memref<3x2x128xf32, #tpu.memory_space<vmem>>, vector<1x2x128xf32>
    %32 = vector.shape_cast %31 : vector<1x2x128xf32> to vector<2x128xf32>
    %cst_31 = arith.constant 1.000000e+00 : f32
    %cst_32 = arith.constant 0.000000e+00 : f32
    %33 = vector.broadcast %cst_31 : f32 to vector<2x128xf32>
    %34 = vector.broadcast %cst_32 : f32 to vector<2x128xf32>
    %35 = arith.select %19, %33, %34 : vector<2x128xi1>, vector<2x128xf32>
    %36 = arith.mulf %22, %22 : vector<2x128xf32>
    %37 = arith.addf %35, %36 : vector<2x128xf32>
    %38 = arith.addf %32, %37 : vector<2x128xf32>
    %c0_33 = arith.constant 0 : index
    %c0_34 = arith.constant 0 : index
    %c0_35 = arith.constant 0 : index
    %39 = vector.load %arg8[%c0_33, %c0_34, %c0_35] : memref<3x2x128xf32, #tpu.memory_space<vmem>>, vector<1x2x128xf32>
    %40 = vector.shape_cast %39 : vector<1x2x128xf32> to vector<2x128xf32>
    %41 = vector.shape_cast %38 : vector<2x128xf32> to vector<1x2x128xf32>
    tpu.vector_store %arg8[%c0_33, %c0_34, %c0_35], %41 {strides = array<i32>} : memref<3x2x128xf32, #tpu.memory_space<vmem>>, vector<1x2x128xf32>,
    %c0_36 = arith.constant 0 : index
    %c2_37 = arith.constant 2 : index
    %c0_38 = arith.constant 0 : index
    %c0_39 = arith.constant 0 : index
    %42 = vector.load %arg3[%c0_36, %c2_37, %c0_38, %c0_39] : memref<1x4x2x128xf32, #tpu.memory_space<vmem>>, vector<1x1x2x128xf32>
    %43 = vector.shape_cast %42 : vector<1x1x2x128xf32> to vector<2x128xf32>
    %44 = arith.cmpf oeq, %43, %13 : vector<2x128xf32>
    %cst_40 = arith.constant dense<true> : vector<2x128xi1>
    %45 = arith.xori %20, %cst_40 : vector<2x128xi1>
    %46 = arith.andi %44, %45 : vector<2x128xi1>
    %47 = arith.ori %20, %44 : vector<2x128xi1>
    %c0_41 = arith.constant 0 : index
    %c2_42 = arith.constant 2 : index
    %c0_43 = arith.constant 0 : index
    %c0_44 = arith.constant 0 : index
    %48 = vector.load %arg4[%c0_41, %c2_42, %c0_43, %c0_44] : memref<1x4x2x128xf32, #tpu.memory_space<vmem>>, vector<1x1x2x128xf32>
    %49 = vector.shape_cast %48 : vector<1x1x2x128xf32> to vector<2x128xf32>
    %c1_45 = arith.constant 1 : index
    %c0_46 = arith.constant 0 : index
    %c0_47 = arith.constant 0 : index
    %50 = vector.load %arg7[%c1_45, %c0_46, %c0_47] : memref<3x2x128xf32, #tpu.memory_space<vmem>>, vector<1x2x128xf32>
    %51 = vector.shape_cast %50 : vector<1x2x128xf32> to vector<2x128xf32>
    %cst_48 = arith.constant 0.000000e+00 : f32
    %52 = vector.broadcast %cst_48 : f32 to vector<2x128xf32>
    %53 = arith.select %46, %49, %52 : vector<2x128xi1>, vector<2x128xf32>
    %54 = arith.addf %51, %53 : vector<2x128xf32>
    %c1_49 = arith.constant 1 : index
    %c0_50 = arith.constant 0 : index
    %c0_51 = arith.constant 0 : index
    %55 = vector.load %arg7[%c1_49, %c0_50, %c0_51] : memref<3x2x128xf32, #tpu.memory_space<vmem>>, vector<1x2x128xf32>
    %56 = vector.shape_cast %55 : vector<1x2x128xf32> to vector<2x128xf32>
    %57 = vector.shape_cast %54 : vector<2x128xf32> to vector<1x2x128xf32>
    tpu.vector_store %arg7[%c1_49, %c0_50, %c0_51], %57 {strides = array<i32>} : memref<3x2x128xf32, #tpu.memory_space<vmem>>, vector<1x2x128xf32>,
    %c1_52 = arith.constant 1 : index
    %c0_53 = arith.constant 0 : index
    %c0_54 = arith.constant 0 : index
    %58 = vector.load %arg8[%c1_52, %c0_53, %c0_54] : memref<3x2x128xf32, #tpu.memory_space<vmem>>, vector<1x2x128xf32>
    %59 = vector.shape_cast %58 : vector<1x2x128xf32> to vector<2x128xf32>
    %cst_55 = arith.constant 1.000000e+00 : f32
    %cst_56 = arith.constant 0.000000e+00 : f32
    %60 = vector.broadcast %cst_55 : f32 to vector<2x128xf32>
    %61 = vector.broadcast %cst_56 : f32 to vector<2x128xf32>
    %62 = arith.select %46, %60, %61 : vector<2x128xi1>, vector<2x128xf32>
    %63 = arith.mulf %49, %49 : vector<2x128xf32>
    %64 = arith.addf %62, %63 : vector<2x128xf32>
    %65 = arith.addf %59, %64 : vector<2x128xf32>
    %c1_57 = arith.constant 1 : index
    %c0_58 = arith.constant 0 : index
    %c0_59 = arith.constant 0 : index
    %66 = vector.load %arg8[%c1_57, %c0_58, %c0_59] : memref<3x2x128xf32, #tpu.memory_space<vmem>>, vector<1x2x128xf32>
    %67 = vector.shape_cast %66 : vector<1x2x128xf32> to vector<2x128xf32>
    %68 = vector.shape_cast %65 : vector<2x128xf32> to vector<1x2x128xf32>
    tpu.vector_store %arg8[%c1_57, %c0_58, %c0_59], %68 {strides = array<i32>} : memref<3x2x128xf32, #tpu.memory_space<vmem>>, vector<1x2x128xf32>,
    %c0_60 = arith.constant 0 : index
    %c3_61 = arith.constant 3 : index
    %c0_62 = arith.constant 0 : index
    %c0_63 = arith.constant 0 : index
    %69 = vector.load %arg3[%c0_60, %c3_61, %c0_62, %c0_63] : memref<1x4x2x128xf32, #tpu.memory_space<vmem>>, vector<1x1x2x128xf32>
    %70 = vector.shape_cast %69 : vector<1x1x2x128xf32> to vector<2x128xf32>
    %71 = arith.cmpf oeq, %70, %13 : vector<2x128xf32>
    %cst_64 = arith.constant dense<true> : vector<2x128xi1>
    %72 = arith.xori %47, %cst_64 : vector<2x128xi1>
    %73 = arith.andi %71, %72 : vector<2x128xi1>
    %c0_65 = arith.constant 0 : index
    %c3_66 = arith.constant 3 : index
    %c0_67 = arith.constant 0 : index
    %c0_68 = arith.constant 0 : index
    %74 = vector.load %arg4[%c0_65, %c3_66, %c0_67, %c0_68] : memref<1x4x2x128xf32, #tpu.memory_space<vmem>>, vector<1x1x2x128xf32>
    %75 = vector.shape_cast %74 : vector<1x1x2x128xf32> to vector<2x128xf32>
    %c2_69 = arith.constant 2 : index
    %c0_70 = arith.constant 0 : index
    %c0_71 = arith.constant 0 : index
    %76 = vector.load %arg7[%c2_69, %c0_70, %c0_71] : memref<3x2x128xf32, #tpu.memory_space<vmem>>, vector<1x2x128xf32>
    %77 = vector.shape_cast %76 : vector<1x2x128xf32> to vector<2x128xf32>
    %cst_72 = arith.constant 0.000000e+00 : f32
    %78 = vector.broadcast %cst_72 : f32 to vector<2x128xf32>
    %79 = arith.select %73, %75, %78 : vector<2x128xi1>, vector<2x128xf32>
    %80 = arith.addf %77, %79 : vector<2x128xf32>
    %c2_73 = arith.constant 2 : index
    %c0_74 = arith.constant 0 : index
    %c0_75 = arith.constant 0 : index
    %81 = vector.load %arg7[%c2_73, %c0_74, %c0_75] : memref<3x2x128xf32, #tpu.memory_space<vmem>>, vector<1x2x128xf32>
    %82 = vector.shape_cast %81 : vector<1x2x128xf32> to vector<2x128xf32>
    %83 = vector.shape_cast %80 : vector<2x128xf32> to vector<1x2x128xf32>
    tpu.vector_store %arg7[%c2_73, %c0_74, %c0_75], %83 {strides = array<i32>} : memref<3x2x128xf32, #tpu.memory_space<vmem>>, vector<1x2x128xf32>,
    %c2_76 = arith.constant 2 : index
    %c0_77 = arith.constant 0 : index
    %c0_78 = arith.constant 0 : index
    %84 = vector.load %arg8[%c2_76, %c0_77, %c0_78] : memref<3x2x128xf32, #tpu.memory_space<vmem>>, vector<1x2x128xf32>
    %85 = vector.shape_cast %84 : vector<1x2x128xf32> to vector<2x128xf32>
    %cst_79 = arith.constant 1.000000e+00 : f32
    %cst_80 = arith.constant 0.000000e+00 : f32
    %86 = vector.broadcast %cst_79 : f32 to vector<2x128xf32>
    %87 = vector.broadcast %cst_80 : f32 to vector<2x128xf32>
    %88 = arith.select %73, %86, %87 : vector<2x128xi1>, vector<2x128xf32>
    %89 = arith.mulf %75, %75 : vector<2x128xf32>
    %90 = arith.addf %88, %89 : vector<2x128xf32>
    %91 = arith.addf %85, %90 : vector<2x128xf32>
    %c2_81 = arith.constant 2 : index
    %c0_82 = arith.constant 0 : index
    %c0_83 = arith.constant 0 : index
    %92 = vector.load %arg8[%c2_81, %c0_82, %c0_83] : memref<3x2x128xf32, #tpu.memory_space<vmem>>, vector<1x2x128xf32>
    %93 = vector.shape_cast %92 : vector<1x2x128xf32> to vector<2x128xf32>
    %94 = vector.shape_cast %91 : vector<2x128xf32> to vector<1x2x128xf32>
    tpu.vector_store %arg8[%c2_81, %c0_82, %c0_83], %94 {strides = array<i32>} : memref<3x2x128xf32, #tpu.memory_space<vmem>>, vector<1x2x128xf32>,
    %c0_i32_84 = arith.constant 0 : i32
    %95 = arith.cmpi eq, %arg2, %c0_i32_84 : i32
    %96 = arith.extui %95 : i1 to i32
    %c0_i32_85 = arith.constant 0 : i32
    %97 = arith.cmpi ne, %96, %c0_i32_85 : i32
    scf.if %97 {
      %c0_86 = arith.constant 0 : index
      %c0_87 = arith.constant 0 : index
      %c0_88 = arith.constant 0 : index
      %98 = vector.load %arg7[%c0_86, %c0_87, %c0_88] : memref<3x2x128xf32, #tpu.memory_space<vmem>>, vector<3x2x128xf32>
      %cst_89 = arith.constant dense<0.000000e+00> : vector<3x2xf32>
      %99 = vector.multi_reduction <add>, %98, %cst_89 [2] : vector<3x2x128xf32> to vector<3x2xf32>
      %cst_90 = arith.constant dense<0.000000e+00> : vector<3xf32>
      %100 = vector.multi_reduction <add>, %99, %cst_90 [1] : vector<3x2xf32> to vector<3xf32>
      %101 = vector.shape_cast %100 : vector<3xf32> to vector<3x1xf32>
      %c0_91 = arith.constant 0 : index
      %c0_92 = arith.constant 0 : index
      %c0_93 = arith.constant 0 : index
      %c0_94 = arith.constant 0 : index
      %102 = vector.load %arg5[%c0_91, %c0_92, %c0_93, %c0_94] : memref<1x1x3x1xf32, #tpu.memory_space<vmem>>, vector<1x1x3x1xf32>
      %103 = vector.shape_cast %102 : vector<1x1x3x1xf32> to vector<3x1xf32>
      %104 = vector.shape_cast %101 : vector<3x1xf32> to vector<1x1x3x1xf32>
      tpu.vector_store %arg5[%c0_91, %c0_92, %c0_93, %c0_94], %104 {strides = array<i32>} : memref<1x1x3x1xf32, #tpu.memory_space<vmem>>, vector<1x1x3x1xf32>,
      %c0_95 = arith.constant 0 : index
      %c0_96 = arith.constant 0 : index
      %c0_97 = arith.constant 0 : index
      %105 = vector.load %arg8[%c0_95, %c0_96, %c0_97] : memref<3x2x128xf32, #tpu.memory_space<vmem>>, vector<3x2x128xf32>
      %cst_98 = arith.constant dense<0.000000e+00> : vector<3x2xf32>
      %106 = vector.multi_reduction <add>, %105, %cst_98 [2] : vector<3x2x128xf32> to vector<3x2xf32>
      %cst_99 = arith.constant dense<0.000000e+00> : vector<3xf32>
      %107 = vector.multi_reduction <add>, %106, %cst_99 [1] : vector<3x2xf32> to vector<3xf32>
      %108 = vector.shape_cast %107 : vector<3xf32> to vector<3x1xf32>
      %c0_100 = arith.constant 0 : index
      %c0_101 = arith.constant 0 : index
      %c0_102 = arith.constant 0 : index
      %c0_103 = arith.constant 0 : index
      %109 = vector.load %arg6[%c0_100, %c0_101, %c0_102, %c0_103] : memref<1x1x3x1xf32, #tpu.memory_space<vmem>>, vector<1x1x3x1xf32>
      %110 = vector.shape_cast %109 : vector<1x1x3x1xf32> to vector<3x1xf32>
      %111 = vector.shape_cast %108 : vector<3x1xf32> to vector<1x1x3x1xf32>
      tpu.vector_store %arg6[%c0_100, %c0_101, %c0_102, %c0_103], %111 {strides = array<i32>} : memref<1x1x3x1xf32, #tpu.memory_space<vmem>>, vector<1x1x3x1xf32>,
    } else {
    }
    return
  }
  func.func @transform_0(%arg0: i32, %arg1: i32, %arg2: i32) -> (i32, i32, i32, i32) {
    %c1_i32 = arith.constant 1 : i32
    %0 = arith.muli %arg1, %c1_i32 : i32
    %1 = arith.addi %0, %arg2 : i32
    %c0_i32 = arith.constant 0 : i32
    %c0_i32_0 = arith.constant 0 : i32
    %c0_i32_1 = arith.constant 0 : i32
    return %arg0, %c0_i32, %1, %c0_i32_0 : i32, i32, i32, i32
  }
  func.func @transform_1(%arg0: i32, %arg1: i32, %arg2: i32) -> (i32, i32, i32, i32) {
    %c1_i32 = arith.constant 1 : i32
    %0 = arith.muli %arg1, %c1_i32 : i32
    %1 = arith.addi %0, %arg2 : i32
    %c0_i32 = arith.constant 0 : i32
    %c0_i32_0 = arith.constant 0 : i32
    %c0_i32_1 = arith.constant 0 : i32
    return %arg0, %c0_i32, %1, %c0_i32_0 : i32, i32, i32, i32
  }
  func.func @transform_2(%arg0: i32, %arg1: i32, %arg2: i32) -> (i32, i32, i32, i32) {
    %c0_i32 = arith.constant 0 : i32
    %c0_i32_0 = arith.constant 0 : i32
    %c0_i32_1 = arith.constant 0 : i32
    return %arg0, %arg1, %c0_i32, %c0_i32_0 : i32, i32, i32, i32
  }
  func.func @transform_3(%arg0: i32, %arg1: i32, %arg2: i32) -> (i32, i32, i32, i32) {
    %c0_i32 = arith.constant 0 : i32
    %c0_i32_0 = arith.constant 0 : i32
    %c0_i32_1 = arith.constant 0 : i32
    return %arg0, %arg1, %c0_i32, %c0_i32_0 : i32, i32, i32, i32
  }
}

</mosaic_0001>

<llo_original>
// kernel: tpu_custom_call.1
$region0: #{tpu_custom_call.1}
  #allocation0 [shape = 'u32[]', space=smem, size = 0x4, offset = 0x4, fixed_abs, tag = 'smem constant byte address 0x4 - core index']
  #allocation1 [shape = 'u32[144,128]{1,0:T(1,128)}', space=vmem, size = 0x12000, scoped, tag = 'internal scratch']
  #allocation2 [shape = 'f32[3,2,128]{2,1,0:T(2,128)}', space=vmem, size = 0xc00, scoped, tag = 'scratch operand']
  #allocation3 [shape = 'f32[3,2,128]{2,1,0:T(2,128)}', space=vmem, size = 0xc00, scoped, tag = 'scratch operand']
  %s0 = inlined_call_operand.hbm [shape: f32[2,4,2,128], index: 0, kind: input, shape index: {}]
  %s1 = inlined_call_operand.hbm [shape: f32[2,4,2,128], index: 1, kind: input, shape index: {}]
  %s2 = inlined_call_operand.vmem [shape: f32[2,1,3,1], index: 2, kind: output, shape index: {0}]
  %s3 = inlined_call_operand.vmem [shape: f32[2,1,3,1], index: 3, kind: output, shape index: {1}]
  %4 = xla_tuple %s2, %s3
  %s5 = sld [smem:[#allocation0]]
  $region65: #{tpu_custom_call.1} parent=0
    _
  %s7 = ssub.s32 1, %s5
  %s8 = scalar_select 0, %s7, %s5
  $region1: #{tpu_custom_call.1} parent=0
    #allocation4 [shape = 'u8[8192]{0}', space=vmem, size = 0x2000, scoped, tag = 'input window, operand 0']
    #allocation5 [shape = 's32[2]{0}', space=sflag, size = 0x8, scoped, tag = 'scoped memory for tpu_custom_call.1']
    #allocation6 [shape = 'u8[8192]{0}', space=vmem, size = 0x2000, scoped, tag = 'input window, operand 1']
    #allocation7 [shape = 's32[2]{0}', space=sflag, size = 0x8, scoped, tag = 'scoped memory for tpu_custom_call.1']
    %9 = vsyncpa [#allocation5], 0
    %s10 = scalar_lea.sflag [#allocation5], 1
    %11 = vsyncpa %s10, 0
    %12 = vsyncpa [#allocation7], 0
    %s13 = scalar_lea.sflag [#allocation7], 1
    %14 = vsyncpa %s13, 0
    loop: start=0, step=1, limit=4
    $region2: #{tpu_custom_call.1} parent=1 // loop_pre_header
      _
    $region3: #{tpu_custom_call.1} parent=1 // loop_header
      %s16 = sphi 0, %s20
      %p17 = scmp.ge.s32.totalorder %s16, 4
      %s23 = sphi 0, %s42
      %s24 = sphi 0, %s38
      %s25 = sphi 0, %s34
      %s26 = sphi 0, %s23
      %s27 = sphi 0, %s24
      %s28 = sphi 0, %s25
      %s29 = sphi 0, %s26
      %s30 = sphi 0, %s27
      %s31 = sphi 0, %s28
      %s49 = sphi 0, %s51
      %s52 = sphi 0, %s49
      %s53 = sphi 0, %s52
      %s69 = sphi 0, %s53
      %s79 = sphi 0, %s81
      %s82 = sphi 0, %s79
      %s83 = sphi 0, %s82
      %s99 = sphi 0, %s83
      %s107 = sphi 0, %s109
      %s110 = sphi 0, %s107
      %s111 = sphi 0, %s110
      %s127 = sphi 0, %s111
      %s135 = sphi 0, %s137
      %s138 = sphi 0, %s135
      %s139 = sphi 0, %s138
      %s155 = sphi 0, %s139
    $region4: #{tpu_custom_call.1} parent=1 // loop_header_branch
      %19 = sbr.rel (%p17) target = $region8
    $region5: #{tpu_custom_call.1} parent=1 // loop_body
      %s21 = ssub.s32 %s16, 1
      %s22 = ssub.s32 %s16, 2
      %s32 = sadd.s32 1, %s25
      %p33 = scmp.ge.s32.totalorder %s32, 1
      %s34 = scalar_select %p33, 0, %s32
      %s35 = sadd.s32 1, %s24
      %s36 = scalar_select %p33, %s35, %s24
      %p37 = scmp.ge.s32.totalorder %s36, 1
      %s38 = scalar_select %p37, 0, %s36
      %s39 = sadd.s32 1, %s23
      %s40 = scalar_select %p37, %s39, %s23
      %p41 = scmp.ge.s32.totalorder %s40, 2
      %s42 = scalar_select %p41, 0, %s40
      %s43 = sadd.s32 %s24, %s25
      %s44 = sadd.s32 %s38, %s34
      %s45 = ssub.s32 %s23, %s42
      %s46 = ssub.s32 %s43, %s44
      %s47 = sor.u32 %s45, %s46
      %p48 = scmp.eq.s32.totalorder %s47, 0
      %s50 = sadd.s32 %s49, 1
      %s51 = scalar_select %p48, %s49, %s50
      %p54 = pneg %p48
      %p55 = scmp.eq.s32.totalorder %s16, 1
      %p56 = por %p54, %p55
      %p57 = scmp.ne.s32.totalorder %s49, %s52
      %p58 = scmp.eq.s32.totalorder %s16, 0
      %p59 = por %p57, %p58
      %p60 = scmp.ne.s32.totalorder %s49, %s52
      %p61 = scmp.eq.s32.totalorder %s21, 1
      %p62 = por %p60, %p61
      %p63 = scmp.ne.s32.totalorder %s52, %s53
      %p64 = scmp.eq.s32.totalorder %s21, 0
      %p65 = por %p63, %p64
      %p66 = scmp.ne.s32.totalorder %s52, %s53
      %p67 = scmp.eq.s32.totalorder %s22, 1
      %p68 = por %p66, %p67
      %p70 = scmp.ne.s32.totalorder %s53, %s69
      %p71 = scmp.eq.s32.totalorder %s22, 0
      %p72 = por %p70, %p71
      %s73 = sadd.s32 %s24, %s25
      %s74 = sadd.s32 %s38, %s34
      %s75 = ssub.s32 %s23, %s42
      %s76 = ssub.s32 %s73, %s74
      %s77 = sor.u32 %s75, %s76
      %p78 = scmp.eq.s32.totalorder %s77, 0
      %s80 = sadd.s32 %s79, 1
      %s81 = scalar_select %p78, %s79, %s80
      %p84 = pneg %p78
      %p85 = scmp.eq.s32.totalorder %s16, 1
      %p86 = por %p84, %p85
      %p87 = scmp.ne.s32.totalorder %s79, %s82
      %p88 = scmp.eq.s32.totalorder %s16, 0
      %p89 = por %p87, %p88
      %p90 = scmp.ne.s32.totalorder %s79, %s82
      %p91 = scmp.eq.s32.totalorder %s21, 1
      %p92 = por %p90, %p91
      %p93 = scmp.ne.s32.totalorder %s82, %s83
      %p94 = scmp.eq.s32.totalorder %s21, 0
      %p95 = por %p93, %p94
      %p96 = scmp.ne.s32.totalorder %s82, %s83
      %p97 = scmp.eq.s32.totalorder %s22, 1
      %p98 = por %p96, %p97
      %p100 = scmp.ne.s32.totalorder %s83, %s99
      %p101 = scmp.eq.s32.totalorder %s22, 0
      %p102 = por %p100, %p101
      %s103 = ssub.s32 %s23, %s42
      %s104 = ssub.s32 %s24, %s38
      %s105 = sor.u32 %s103, %s104
      %p106 = scmp.eq.s32.totalorder %s105, 0
      %s108 = sadd.s32 %s107, 1
      %s109 = scalar_select %p106, %s107, %s108
      %p112 = pneg %p106
      %p113 = scmp.eq.s32.totalorder %s16, 1
      %p114 = por %p112, %p113
      %p115 = scmp.ne.s32.totalorder %s107, %s110
      %p116 = scmp.eq.s32.totalorder %s16, 0
      %p117 = por %p115, %p116
      %p118 = scmp.ne.s32.totalorder %s107, %s110
      %p119 = scmp.eq.s32.totalorder %s21, 1
      %p120 = por %p118, %p119
      %p121 = scmp.ne.s32.totalorder %s110, %s111
      %p122 = scmp.eq.s32.totalorder %s21, 0
      %p123 = por %p121, %p122
      %p124 = scmp.ne.s32.totalorder %s110, %s111
      %p125 = scmp.eq.s32.totalorder %s22, 1
      %p126 = por %p124, %p125
      %p128 = scmp.ne.s32.totalorder %s111, %s127
      %p129 = scmp.eq.s32.totalorder %s22, 0
      %p130 = por %p128, %p129
      %s131 = ssub.s32 %s23, %s42
      %s132 = ssub.s32 %s24, %s38
      %s133 = sor.u32 %s131, %s132
      %p134 = scmp.eq.s32.totalorder %s133, 0
      %s136 = sadd.s32 %s135, 1
      %s137 = scalar_select %p134, %s135, %s136
      %p140 = pneg %p134
      %p141 = scmp.eq.s32.totalorder %s16, 1
      %p142 = por %p140, %p141
      %p143 = scmp.ne.s32.totalorder %s135, %s138
      %p144 = scmp.eq.s32.totalorder %s16, 0
      %p145 = por %p143, %p144
      %p146 = scmp.ne.s32.totalorder %s135, %s138
      %p147 = scmp.eq.s32.totalorder %s21, 1
      %p148 = por %p146, %p147
      %p149 = scmp.ne.s32.totalorder %s138, %s139
      %p150 = scmp.eq.s32.totalorder %s21, 0
      %p151 = por %p149, %p150
      %p152 = scmp.ne.s32.totalorder %s138, %s139
      %p153 = scmp.eq.s32.totalorder %s22, 1
      %p154 = por %p152, %p153
      %p156 = scmp.ne.s32.totalorder %s139, %s155
      %p157 = scmp.eq.s32.totalorder %s22, 0
      %p158 = por %p156, %p157
      %p159 = scmp.le.s32.totalorder 1, %s16
      %p160 = scmp.lt.s32.totalorder %s16, 3
      %p161 = pnand %p159, %p160
      %p162 = pneg %p161
      // Predicated region
      $region9: #{tpu_custom_call.1} parent=5 // pred_check
        _
      $region10: #{tpu_custom_call.1} parent=5 // pred_check_branch
        %164 = sbr.rel (%p161) target = $region12
      $region11: #{tpu_custom_call.1} parent=5 // pred_region
        %s165 = ssub.s32 %s16, 1
      $region12: #{tpu_custom_call.1} parent=5 // pred_fallthru
        _
      %p166 = scmp.lt.s32.totalorder %s16, 2
      // Predicated region
      $region13: #{tpu_custom_call.1} parent=5 // pred_check
        %p167 = pneg %p166
      $region14: #{tpu_custom_call.1} parent=5 // pred_check_branch
        %169 = sbr.rel (%p167) target = $region16
      $region15: #{tpu_custom_call.1} parent=5 // pred_region
        // Predicated region
        $region17: #{tpu_custom_call.1} parent=15 // pred_check
          %p170 = pneg %p59
        $region18: #{tpu_custom_call.1} parent=15 // pred_check_branch
          %172 = sbr.rel (%p170) target = $region20
        $region19: #{tpu_custom_call.1} parent=15 // pred_region
          %s173 = sand.u32 %s49, 1
          %s174 = scalar_lea.sflag [#allocation5], %s173
          %s175 = sand.u32 %s49, 1
          %s176 = smul.addr %s175, 8
          %s177 = scalar_lea.vmem [#allocation4], %s176
          %s178 = sadd.s32 %s24, %s25
          %s180 = ssub.s32 128, 128
          %181 = vsyncadd %s174, %s180
          %s182 = smul.addr %s23, 4
          %s183 = sadd.s32 %s178, %s182
          %s184 = smul.addr %s183, 32
          %s185 = scalar_lea.hbm %s0, %s184
          %s186 = sshll.u32 %s177, 4
          %s187 = int_to_ptr.vmem [resolvable:$true] %s186
          %192 = dma.hbm_to_vmem [thread:$0]  %s185, 128, %s187, %s174, 32, 32, 2
        $region20: #{tpu_custom_call.1} parent=15 // pred_fallthru
          _
        // Predicated region
        $region21: #{tpu_custom_call.1} parent=15 // pred_check
          %p193 = pneg %p89
        $region22: #{tpu_custom_call.1} parent=15 // pred_check_branch
          %195 = sbr.rel (%p193) target = $region24
        $region23: #{tpu_custom_call.1} parent=15 // pred_region
          %s196 = sand.u32 %s79, 1
          %s197 = scalar_lea.sflag [#allocation7], %s196
          %s198 = sand.u32 %s79, 1
          %s199 = smul.addr %s198, 8
          %s200 = scalar_lea.vmem [#allocation6], %s199
          %s201 = sadd.s32 %s24, %s25
          %s203 = ssub.s32 128, 128
          %204 = vsyncadd %s197, %s203
          %s205 = smul.addr %s23, 4
          %s206 = sadd.s32 %s201, %s205
          %s207 = smul.addr %s206, 32
          %s208 = scalar_lea.hbm %s1, %s207
          %s209 = sshll.u32 %s200, 4
          %s210 = int_to_ptr.vmem [resolvable:$true] %s209
          %215 = dma.hbm_to_vmem [thread:$0]  %s208, 128, %s210, %s197, 32, 32, 2
        $region24: #{tpu_custom_call.1} parent=15 // pred_fallthru
          _
      $region16: #{tpu_custom_call.1} parent=5 // pred_fallthru
        _
      %p216 = scmp.le.s32.totalorder 1, %s16
      %p217 = scmp.lt.s32.totalorder %s16, 3
      %p218 = pnand %p216, %p217
      %p219 = pneg %p218
      // Predicated region
      $region25: #{tpu_custom_call.1} parent=5 // pred_check
        _
      $region26: #{tpu_custom_call.1} parent=5 // pred_check_branch
        %221 = sbr.rel (%p218) target = $region28
      $region27: #{tpu_custom_call.1} parent=5 // pred_region
        %s222 = ssub.s32 %s16, 1
        %s223 = sand.u32 %s52, 1
        %s224 = scalar_lea.sflag [#allocation5], %s223
        %s225 = sand.u32 %s52, 1
        %s226 = smul.addr %s225, 8
        %s227 = scalar_lea.vmem [#allocation4], %s226
        // Predicated region
        $region29: #{tpu_custom_call.1} parent=27 // pred_check
          %p228 = pneg %p65
        $region30: #{tpu_custom_call.1} parent=27 // pred_check_branch
          %230 = sbr.rel (%p228) target = $region32
        $region31: #{tpu_custom_call.1} parent=27 // pred_region
          %231 = dma.done %s224, 128
        $region32: #{tpu_custom_call.1} parent=27 // pred_fallthru
          _
        %s232 = sand.u32 %s82, 1
        %s233 = scalar_lea.sflag [#allocation7], %s232
        %s234 = sand.u32 %s82, 1
        %s235 = smul.addr %s234, 8
        %s236 = scalar_lea.vmem [#allocation6], %s235
        // Predicated region
        $region33: #{tpu_custom_call.1} parent=27 // pred_check
          %p237 = pneg %p95
        $region34: #{tpu_custom_call.1} parent=27 // pred_check_branch
          %239 = sbr.rel (%p237) target = $region36
        $region35: #{tpu_custom_call.1} parent=27 // pred_region
          %240 = dma.done %s233, 128
        $region36: #{tpu_custom_call.1} parent=27 // pred_fallthru
          _
        %s241 = sand.u32 %s52, 1
        %s242 = scalar_lea.sflag [#allocation5], %s241
        %s243 = sand.u32 %s52, 1
        %s244 = smul.addr %s243, 8
        %s245 = scalar_lea.vmem [#allocation4], %s244
        %p246 = pneg %p65
        %p247 = pneg %p62
        %s248 = sand.u32 %s82, 1
        %s249 = scalar_lea.sflag [#allocation7], %s248
        %s250 = sand.u32 %s82, 1
        %s251 = smul.addr %s250, 8
        %s252 = scalar_lea.vmem [#allocation6], %s251
        %p253 = pneg %p95
        %p254 = pneg %p92
        %p255 = pneg %p123
        %p256 = pneg %p120
        %p257 = scmp.lt.s32.totalorder %s26, 1
        %s258 = scalar_select %p257, %s26, 1
        %p259 = scmp.lt.s32.totalorder %s27, 0
        %s260 = scalar_select %p259, %s27, 0
        %s261 = sadd.s32 %s260, %s258
        %s262 = smul.addr %s261, 4
        %s263 = scalar_lea.vmem %s2, %s262
        %p264 = pneg %p151
        %p265 = pneg %p148
        %p266 = scmp.lt.s32.totalorder %s26, 1
        %s267 = scalar_select %p266, %s26, 1
        %p268 = scmp.lt.s32.totalorder %s27, 0
        %s269 = scalar_select %p268, %s27, 0
        %s270 = sadd.s32 %s269, %s267
        %s271 = smul.addr %s270, 4
        %s272 = scalar_lea.vmem %s3, %s271
        %s273 = sadd.s32 %s27, %s28
        %s274 = sadd.s32 %s27, %s28
        %p275 = scmp.lt.s32.totalorder %s26, 1
        %s276 = scalar_select %p275, %s26, 1
        %p277 = scmp.lt.s32.totalorder %s27, 0
        %s278 = scalar_select %p277, %s27, 0
        %s279 = sadd.s32 %s278, %s276
        %s280 = smul.addr %s279, 4
        %s281 = scalar_lea.vmem %s2, %s280
        %p282 = scmp.lt.s32.totalorder %s26, 1
        %s283 = scalar_select %p282, %s26, 1
        %p284 = scmp.lt.s32.totalorder %s27, 0
        %s285 = scalar_select %p284, %s27, 0
        %s286 = sadd.s32 %s285, %s283
        %s287 = smul.addr %s286, 4
        %s288 = scalar_lea.vmem %s3, %s287
        %p289 = scmp.eq.s32.totalorder %s28, 0
        // Predicated region
        $region37: #{tpu_custom_call.1} parent=27 // pred_check
          %p290 = pneg %p289
        $region38: #{tpu_custom_call.1} parent=27 // pred_check_branch
          %292 = sbr.rel (%p290) target = $region40
        $region39: #{tpu_custom_call.1} parent=27 // pred_region
          %293 = vst [vmem:[#allocation2] sm:$0x3] 0.0
          %294 = vst [vmem:[#allocation2 + $0x2] sm:$0x3] 0.0
          %295 = vst [vmem:[#allocation2 + $0x4] sm:$0x3] 0.0
          %296 = vst [vmem:[#allocation3] sm:$0x3] 0.0
          %297 = vst [vmem:[#allocation3 + $0x2] sm:$0x3] 0.0
          %298 = vst [vmem:[#allocation3 + $0x4] sm:$0x3] 0.0
        $region40: #{tpu_custom_call.1} parent=27 // pred_fallthru
          _
        %v299 = vld [vmem:[%s227] sm:$0x3]
        %s300 = scalar_lea.vmem %s227, 2 [#allocation4]
        %v301 = vld [vmem:[%s300] sm:$0x3]
        %v302 = vmax.f32 %v299, %v301
        %s303 = scalar_lea.vmem %s227, 4 [#allocation4]
        %v304 = vld [vmem:[%s303] sm:$0x3]
        %v305 = vmax.f32 %v302, %v304
        %s306 = scalar_lea.vmem %s227, 6 [#allocation4]
        %v307 = vld [vmem:[%s306] sm:$0x3]
        %v308 = vmax.f32 %v305, %v307
        %vm309 = vcmp.eq.f32.partialorder %v299, %v308
        %vm310 = vcmp.eq.f32.partialorder %v301, %v308
        %vm311 = vmxor %vm309, 1
        %vm312 = vmand %vm310, %vm311
        %vm313 = vmor %vm309, %vm310
        %s314 = scalar_lea.vmem %s236, 2 [#allocation6]
        %v315 = vld [vmem:[%s314] sm:$0x3]
        %v316 = vld [vmem:[#allocation2] sm:$0x3]
        %v317 = vsel %vm312, %v315, 0.0
        %v318 = vadd.f32 %v316, %v317
        %319 = vst [vmem:[#allocation2] sm:$0x3] %v318
        %v320 = vld [vmem:[#allocation3] sm:$0x3]
        %v321 = vsel %vm312, 1.0, 0.0
        %v322 = vmul.f32 %v315, %v315
        %v323 = vadd.f32 %v321, %v322
        %v324 = vadd.f32 %v320, %v323
        %325 = vst [vmem:[#allocation3] sm:$0x3] %v324
        %v326 = vld [vmem:[%s303] sm:$0x3]
        %vm327 = vcmp.eq.f32.partialorder %v326, %v308
        %vm328 = vmxor %vm313, 1
        %vm329 = vmand %vm327, %vm328
        %vm330 = vmor %vm313, %vm327
        %s331 = scalar_lea.vmem %s236, 4 [#allocation6]
        %v332 = vld [vmem:[%s331] sm:$0x3]
        %s333 = scalar_lea.vmem [#allocation2], 2
        %v334 = vld [vmem:[%s333] sm:$0x3]
        %v335 = vsel %vm329, %v332, 0.0
        %v336 = vadd.f32 %v334, %v335
        %337 = vst [vmem:[%s333] sm:$0x3] %v336
        %s338 = scalar_lea.vmem [#allocation3], 2
        %v339 = vld [vmem:[%s338] sm:$0x3]
        %v340 = vsel %vm329, 1.0, 0.0
        %v341 = vmul.f32 %v332, %v332
        %v342 = vadd.f32 %v340, %v341
        %v343 = vadd.f32 %v339, %v342
        %344 = vst [vmem:[%s338] sm:$0x3] %v343
        %v345 = vld [vmem:[%s306] sm:$0x3]
        %vm346 = vcmp.eq.f32.partialorder %v345, %v308
        %vm347 = vmxor %vm330, 1
        %vm348 = vmand %vm346, %vm347
        %s349 = scalar_lea.vmem %s236, 6 [#allocation6]
        %v350 = vld [vmem:[%s349] sm:$0x3]
        %s351 = scalar_lea.vmem [#allocation2], 4
        %v352 = vld [vmem:[%s351] sm:$0x3]
        %v353 = vsel %vm348, %v350, 0.0
        %v354 = vadd.f32 %v352, %v353
        %355 = vst [vmem:[%s351] sm:$0x3] %v354
        %s356 = scalar_lea.vmem [#allocation3], 4
        %v357 = vld [vmem:[%s356] sm:$0x3]
        %v358 = vsel %vm348, 1.0, 0.0
        %v359 = vmul.f32 %v350, %v350
        %v360 = vadd.f32 %v358, %v359
        %v361 = vadd.f32 %v357, %v360
        %362 = vst [vmem:[%s356] sm:$0x3] %v361
        // Predicated region
        $region41: #{tpu_custom_call.1} parent=27 // pred_check
          %p363 = pneg %p289
        $region42: #{tpu_custom_call.1} parent=27 // pred_check_branch
          %365 = sbr.rel (%p363) target = $region44
        $region43: #{tpu_custom_call.1} parent=27 // pred_region
          %v366 = vld [vmem:[#allocation2] sm:$0x3]
          %v367 = vld [vmem:[#allocation2 + $0x2] sm:$0x3]
          %v368 = vld [vmem:[#allocation2 + $0x4] sm:$0x3]
          %vm369 = vcmask 1041408
          %v370 = vsel %vm369, %v366, 0.0
          %371 = vadd.xlane.f32.xlu0 %v370
          %v372 = vpop.xlane.xlu0 %371
          %v373 = vsel %vm369, %v367, 0.0
          %374 = vadd.xlane.f32.xlu0 %v373
          %v375 = vpop.xlane.xlu0 %374
          %v376 = vsel %vm369, %v368, 0.0
          %377 = vadd.xlane.f32.xlu0 %v376
          %v378 = vpop.xlane.xlu0 %377
          %v382 = vlaneseq
          %v383 = vand.u32 %v382, 127
          %v384 = vlaneseq
          %v385 = vshrl.u32 %v384, 7
          %v386 = vsub.s32 %v383, %v385
          %v387 = vrot.slane %v372, %v386
          %v388 = vlaneseq
          %v389 = vshrl.u32 %v388, 7
          %v390 = vsub.s32 %v383, %v389
          %v391 = vrot.slane %v375, %v390
          %v392 = vlaneseq
          %v393 = vshrl.u32 %v392, 7
          %v394 = vsub.s32 %v383, %v393
          %v395 = vrot.slane %v378, %v394
          %vm396 = vcmask 1041409
          %v397 = vsel %vm396, %v391, %v387
          %vm398 = vcmask 1042434
          %v399 = vsel %vm398, %v395, %v397
          %vm401 = vcmask 10240
          %v402 = vsel %vm401, %v399, 0.0
          %403 = vadd.xlane.f32.xlu0 %v402
          %v404 = vpop.xlane.xlu0 %403
          %vm405 = vcmask 2048
          %406 = vst.msk [vmem:[%s281] sm:$0x7] %vm405, %v404
          %v407 = vld [vmem:[#allocation3] sm:$0x3]
          %v408 = vld [vmem:[#allocation3 + $0x2] sm:$0x3]
          %v409 = vld [vmem:[#allocation3 + $0x4] sm:$0x3]
          %v410 = vsel %vm369, %v407, 0.0
          %411 = vadd.xlane.f32.xlu0 %v410
          %v412 = vpop.xlane.xlu0 %411
          %v413 = vsel %vm369, %v408, 0.0
          %414 = vadd.xlane.f32.xlu0 %v413
          %v415 = vpop.xlane.xlu0 %414
          %v416 = vsel %vm369, %v409, 0.0
          %417 = vadd.xlane.f32.xlu0 %v416
          %v418 = vpop.xlane.xlu0 %417
          %v422 = vlaneseq
          %v423 = vshrl.u32 %v422, 7
          %v424 = vsub.s32 %v383, %v423
          %v425 = vrot.slane %v412, %v424
          %v426 = vlaneseq
          %v427 = vshrl.u32 %v426, 7
          %v428 = vsub.s32 %v383, %v427
          %v429 = vrot.slane %v415, %v428
          %v430 = vlaneseq
          %v431 = vshrl.u32 %v430, 7
          %v432 = vsub.s32 %v383, %v431
          %v433 = vrot.slane %v418, %v432
          %v434 = vsel %vm396, %v429, %v425
          %v435 = vsel %vm398, %v433, %v434
          %v437 = vsel %vm401, %v435, 0.0
          %438 = vadd.xlane.f32.xlu0 %v437
          %v439 = vpop.xlane.xlu0 %438
          %440 = vst.msk [vmem:[%s288] sm:$0x7] %vm405, %v439
        $region44: #{tpu_custom_call.1} parent=27 // pred_fallthru
          _
        %p441 = scmp.lt.s32.totalorder %s26, 1
        %s442 = scalar_select %p441, %s26, 1
        %p443 = scmp.lt.s32.totalorder %s27, 0
        %s444 = scalar_select %p443, %s27, 0
        %s445 = sadd.s32 %s444, %s442
        %s446 = smul.addr %s445, 4
        %s447 = scalar_lea.vmem %s2, %s446
        %p448 = scmp.lt.s32.totalorder %s26, 1
        %s449 = scalar_select %p448, %s26, 1
        %p450 = scmp.lt.s32.totalorder %s27, 0
        %s451 = scalar_select %p450, %s27, 0
        %s452 = sadd.s32 %s451, %s449
        %s453 = smul.addr %s452, 4
        %s454 = scalar_lea.vmem %s3, %s453
        // Predicated region
        $region45: #{tpu_custom_call.1} parent=27 // pred_check
          %p455 = pneg %p120
        $region46: #{tpu_custom_call.1} parent=27 // pred_check_branch
          %457 = sbr.rel (%p455) target = $region48
        $region47: #{tpu_custom_call.1} parent=27 // pred_region
          _
        $region48: #{tpu_custom_call.1} parent=27 // pred_fallthru
          _
        // Predicated region
        $region49: #{tpu_custom_call.1} parent=27 // pred_check
          %p458 = pneg %p148
        $region50: #{tpu_custom_call.1} parent=27 // pred_check_branch
          %460 = sbr.rel (%p458) target = $region52
        $region51: #{tpu_custom_call.1} parent=27 // pred_region
          _
        $region52: #{tpu_custom_call.1} parent=27 // pred_fallthru
          _
      $region28: #{tpu_custom_call.1} parent=5 // pred_fallthru
        _
      %p461 = scmp.le.s32.totalorder 2, %s16
      // Predicated region
      $region53: #{tpu_custom_call.1} parent=5 // pred_check
        %p462 = pneg %p461
      $region54: #{tpu_custom_call.1} parent=5 // pred_check_branch
        %464 = sbr.rel (%p462) target = $region56
      $region55: #{tpu_custom_call.1} parent=5 // pred_region
        %s465 = ssub.s32 %s16, 2
        // Predicated region
        $region57: #{tpu_custom_call.1} parent=55 // pred_check
          %p466 = pneg %p126
        $region58: #{tpu_custom_call.1} parent=55 // pred_check_branch
          %468 = sbr.rel (%p466) target = $region60
        $region59: #{tpu_custom_call.1} parent=55 // pred_region
          %p469 = scmp.lt.s32.totalorder %s29, 1
          %s470 = scalar_select %p469, %s29, 1
          %p471 = scmp.lt.s32.totalorder %s30, 0
          %s472 = scalar_select %p471, %s30, 0
          %s473 = sadd.s32 %s472, %s470
          %s474 = smul.addr %s473, 4
          %s475 = scalar_lea.vmem %s2, %s474
        $region60: #{tpu_custom_call.1} parent=55 // pred_fallthru
          _
        // Predicated region
        $region61: #{tpu_custom_call.1} parent=55 // pred_check
          %p476 = pneg %p154
        $region62: #{tpu_custom_call.1} parent=55 // pred_check_branch
          %478 = sbr.rel (%p476) target = $region64
        $region63: #{tpu_custom_call.1} parent=55 // pred_region
          %p479 = scmp.lt.s32.totalorder %s29, 1
          %s480 = scalar_select %p479, %s29, 1
          %p481 = scmp.lt.s32.totalorder %s30, 0
          %s482 = scalar_select %p481, %s30, 0
          %s483 = sadd.s32 %s482, %s480
          %s484 = smul.addr %s483, 4
          %s485 = scalar_lea.vmem %s3, %s484
        $region64: #{tpu_custom_call.1} parent=55 // pred_fallthru
          _
      $region56: #{tpu_custom_call.1} parent=5 // pred_fallthru
        _
    $region6: #{tpu_custom_call.1} parent=1 // loop_footer
      %s20 = sadd.s32 1, %s16
    $region7: #{tpu_custom_call.1} parent=1 // loop_footer_branch
      %15 = sbr.rel target = $region3
    $region8: #{tpu_custom_call.1} parent=1 // loop_exit
      _
    %486 = vsyncpa [#allocation5], 1
    %s487 = scalar_lea.sflag [#allocation5], 1
    %488 = vsyncpa %s487, 1
    %489 = vsyncpa [#allocation7], 1
    %s490 = scalar_lea.sflag [#allocation7], 1
    %491 = vsyncpa %s490, 1

</llo_original>
